<compile_context>
chip_gen: v6e
topology: v6e:2x2x1
jax: 0.10.0
libtpu: 0.0.40
codegen_flags: <defaults>
</compile_context>

<pallas_src>
import functools

import jax
import jax.numpy as jnp
from jax.experimental import pallas as pl
from jax.experimental.pallas import tpu as pltpu


def decoder_kernel(z_ref, w1_ref, b1_ref, w2_ref, b2_ref, o_ref):
    """One batch-tile of sigmoid(relu(z @ W1 + b1) @ W2 + b2 - 2).

    z_ref : (TB, Z)   compute dtype (bf16/f32)
    w1_ref: (Z, Hp)   compute dtype, hidden zero-padded to a multiple of 128
    b1_ref: (1, Hp)   f32
    w2_ref: (Hp, D)   compute dtype
    b2_ref: (1, D)    f32
    o_ref : (TB, D)   out dtype (bf16 by default)
    """
    # fc1 on the MXU, f32 accumulate; bias + ReLU on the VPU in f32.
    h = jnp.dot(z_ref[...], w1_ref[...], preferred_element_type=jnp.float32)
    h = jnp.maximum(h + b1_ref[...], 0.0)
    # fc2: feed the MXU in the weight dtype (bf16 fast path), f32 accumulate.
    y = jnp.dot(h.astype(w2_ref.dtype), w2_ref[...],
                preferred_element_type=jnp.float32)
    y = y + b2_ref[...]
    # sigmoid(y - 2) = 1 / (1 + exp(-(y - 2))): exp on the EUP, approx
    # reciprocal on the EUP (no full-precision VPU divide). f32 math, cast on
    # the final store only.
    t = jnp.exp(-(y - 2.0))
    o_ref[...] = pl.reciprocal(1.0 + t, approx=True).astype(o_ref.dtype)


def _pick_batch_tile(B):
    """~4 grid steps minimum (keeps both v7x TCs busy via the 'parallel' axis),
    tile capped at 4096 rows to amortize per-grid-step overhead, rounded up to
    a multiple of 256 when large (16 when small) for bf16 (16,128) packing."""
    tb = min(4096, max(16, pl.cdiv(B, 4)))
    mult = 256 if tb >= 256 else 16
    return ((tb + mult - 1) // mult) * mult


@functools.partial(
    jax.jit,
    static_argnames=("h", "w", "tb", "compute_dtype", "out_dtype", "flat_output"))
def decoder_forward(z_what, w1, b1, w2, b2, *, h, w, tb=None,
                    compute_dtype=jnp.bfloat16, out_dtype=jnp.bfloat16,
                    flat_output=False):
    """z_what: (..., z_what_size) -> (-1, 1, h, w), matching the torch module.

    out_dtype defaults to bf16 (sigmoid output in [0,1], rel-err ~4e-3,
    comparable to the bf16-matmul error) to halve output HBM traffic; pass
    out_dtype=jnp.float32 for bit-closer parity with the torch module.
    """
    Z = z_what.shape[-1]
    # Fold any extra leading dims (per-object / per-glimpse) into one big
    # batch axis — same semantics as torch's view(-1, 1, h, w).
    z2 = z_what.reshape(-1, Z)
    B = z2.shape[0]
    H = w1.shape[1]
    D = w2.shape[1]
    assert D == h * w, "fc2 output must equal input_size = h * w"

    # Zero-pad hidden dim to a multiple of 128 (exact: ReLU(0)=0, zero W2 rows).
    # Do NOT pad further (Z=32 / Hp=128 is fine: kernel is HBM-bound, not MXU).
    Hp = ((H + 127) // 128) * 128
    if Hp != H:
        w1 = jnp.pad(w1, ((0, 0), (0, Hp - H)))
        b1 = jnp.pad(b1, ((0, 0), (0, Hp - H)))
        w2 = jnp.pad(w2, ((0, Hp - H), (0, 0)))

    # bf16 matmul operands; biases stay f32.
    z2 = z2.astype(compute_dtype)
    w1 = w1.astype(compute_dtype)
    w2 = w2.astype(compute_dtype)
    b1 = b1.astype(jnp.float32)
    b2 = b2.astype(jnp.float32)

    if tb is None:
        tb = _pick_batch_tile(B)
    grid = (pl.cdiv(B, tb),)

    isz = jnp.dtype(compute_dtype).itemsize
    osz = jnp.dtype(out_dtype).itemsize
    cost = pl.CostEstimate(
        flops=2 * B * (Z * Hp + Hp * D),
        transcendentals=B * D,
        bytes_accessed=(B * Z * isz + Z * Hp * isz + Hp * D * isz
                        + (Hp + D) * 4 + B * D * osz),
    )

    out = pl.pallas_call(
        decoder_kernel,
        out_shape=jax.ShapeDtypeStruct((B, D), out_dtype),
        grid_spec=pltpu.PrefetchScalarGridSpec(
            num_scalar_prefetch=0,
            grid=grid,
            in_specs=[
                pl.BlockSpec((tb, Z), lambda i: (i, 0)),    # z tile
                pl.BlockSpec((Z, Hp), lambda i: (0, 0)),    # W1 (VMEM-resident)
                pl.BlockSpec((1, Hp), lambda i: (0, 0)),    # b1
                pl.BlockSpec((Hp, D), lambda i: (0, 0)),    # W2 (VMEM-resident)
                pl.BlockSpec((1, D), lambda i: (0, 0)),     # b2
            ],
            out_specs=pl.BlockSpec((tb, D), lambda i: (i, 0)),  # lane-dense D
        ),
        compiler_params=pltpu.CompilerParams(
            dimension_semantics=("parallel",),
        ),
        cost_estimate=cost,
    )(z2, w1, b1, w2, b2)

    if flat_output:
        # (B, h*w): lets the consumer avoid a possible lane-padded relayout of
        # the (B,1,16,16) NCHW form if it only needs flat pixels.
        return out
    # view(-1, 1, h, w): NCHW reshape (glue only, outside the kernel).
    return out.reshape(-1, 1, h, w)


def init_decoder_params(key, z_what_size, hidden_size, input_size):
    """Deterministic init mimicking torch.nn.Linear default (U[-1/sqrt(fan_in), +])."""
    k1, k2, k3, k4 = jax.random.split(key, 4)
    lim1 = 1.0 / jnp.sqrt(jnp.float32(z_what_size))
    lim2 = 1.0 / jnp.sqrt(jnp.float32(hidden_size))
    # stored as (in, out) so the kernel computes x @ W + b
    w1 = jax.random.uniform(k1, (z_what_size, hidden_size), jnp.float32, -lim1, lim1)
    b1 = jax.random.uniform(k2, (1, hidden_size), jnp.float32, -lim1, lim1)
    w2 = jax.random.uniform(k3, (hidden_size, input_size), jnp.float32, -lim2, lim2)
    b2 = jax.random.uniform(k4, (1, input_size), jnp.float32, -lim2, lim2)
    return w1, b1, w2, b2


if __name__ == "__main__":
    # arch: z_what_size=32, decoder_hidden_size=64, input_shape=(16, 16)
    Z_WHAT, HIDDEN, H, W = 32, 64, 16, 16
    INPUT_SIZE = H * W
    BATCH = 256   # exercises the batch-tiled grid (4 parallel steps of tb=64)

    key = jax.random.PRNGKey(0)
    kz, kp = jax.random.split(key)
    z_what = jax.random.normal(kz, (BATCH, Z_WHAT), jnp.float32)
    w1, b1, w2, b2 = init_decoder_params(kp, Z_WHAT, HIDDEN, INPUT_SIZE)

    out = decoder_forward(z_what, w1, b1, w2, b2, h=H, w=W)
    out = jax.block_until_ready(out)
    assert out.shape == (BATCH, 1, H, W)
    out_f32 = out.astype(jnp.float32)

    # Reference A: same bf16-matmul math, exact sigmoid, bf16-quantized output
    # (tight-ish tolerance: approx-reciprocal + 1-ulp bf16 rounding headroom).
    zb, w1b, w2b = (z_what.astype(jnp.bfloat16), w1.astype(jnp.bfloat16),
                    w2.astype(jnp.bfloat16))
    hb = jnp.maximum(jnp.dot(zb, w1b, preferred_element_type=jnp.float32) + b1, 0.0)
    yb = jnp.dot(hb.astype(jnp.bfloat16), w2b, preferred_element_type=jnp.float32) + b2
    ref_bf16 = (jax.nn.sigmoid(yb - 2.0).astype(jnp.bfloat16)
                .astype(jnp.float32).reshape(-1, 1, H, W))
    assert jnp.allclose(out_f32, ref_bf16, atol=1e-2, rtol=1e-2), \
        float(jnp.max(jnp.abs(out_f32 - ref_bf16)))

    # Reference B: full-f32 torch-equivalent math (loose tolerance: bf16 quant).
    ref_f32 = jax.nn.sigmoid(
        (jnp.maximum(z_what @ w1 + b1, 0.0) @ w2 + b2) - 2.0
    ).reshape(-1, 1, H, W)
    assert jnp.allclose(out_f32, ref_f32, atol=4e-2, rtol=4e-2), \
        float(jnp.max(jnp.abs(out_f32 - ref_f32)))

    print("KERNEL_OK")
</pallas_src>

<mosaic_0001>
module attributes {stable_mosaic.version = 11 : i64} {
  func.func @decoder_kernel(%arg0: i32, %arg1: memref<64x32xbf16, #tpu.memory_space<vmem>>, %arg2: memref<32x128xbf16, #tpu.memory_space<vmem>>, %arg3: memref<1x128xf32, #tpu.memory_space<vmem>>, %arg4: memref<128x256xbf16, #tpu.memory_space<vmem>>, %arg5: memref<1x256xf32, #tpu.memory_space<vmem>>, %arg6: memref<64x256xbf16, #tpu.memory_space<vmem>>) attributes {dimension_semantics = [#tpu.dimension_semantics<parallel>], iteration_bounds = array<i64: 4>, scalar_prefetch = 0 : i64, scratch_operands = 0 : i64, tpu.core_type = #tpu.core_type<tc>, window_params = [{transform_indices = @transform_0, window_bounds = array<i64: 64, 32>}, {pipeline_mode = #tpu.pipeline_mode<synchronous>, transform_indices = @transform_1, window_bounds = array<i64: 32, 128>}, {pipeline_mode = #tpu.pipeline_mode<synchronous>, transform_indices = @transform_2, window_bounds = array<i64: 1, 128>}, {pipeline_mode = #tpu.pipeline_mode<synchronous>, transform_indices = @transform_3, window_bounds = array<i64: 128, 256>}, {pipeline_mode = #tpu.pipeline_mode<synchronous>, transform_indices = @transform_4, window_bounds = array<i64: 1, 256>}, {transform_indices = @transform_5, window_bounds = array<i64: 64, 256>}]} {
    %c0 = arith.constant 0 : index
    %c0_0 = arith.constant 0 : index
    %0 = vector.load %arg1[%c0, %c0_0] : memref<64x32xbf16, #tpu.memory_space<vmem>>, vector<64x32xbf16>
    %c0_1 = arith.constant 0 : index
    %c0_2 = arith.constant 0 : index
    %1 = vector.load %arg2[%c0_1, %c0_2] : memref<32x128xbf16, #tpu.memory_space<vmem>>, vector<32x128xbf16>
    %cst = arith.constant dense<0.000000e+00> : vector<64x128xf32>
    %2 = tpu.matmul %0, %1, %cst {dimension_numbers = #tpu.dot_dimension_numbers<[1], [0], [0], [1], [0, 0, 1, 1], [], []>} : vector<64x32xbf16>, vector<32x128xbf16>, vector<64x128xf32> -> vector<64x128xf32>
    %c0_3 = arith.constant 0 : index
    %c0_4 = arith.constant 0 : index
    %3 = vector.load %arg3[%c0_3, %c0_4] : memref<1x128xf32, #tpu.memory_space<vmem>>, vector<1x128xf32>
    %4 = vector.broadcast %3 : vector<1x128xf32> to vector<64x128xf32>
    %5 = arith.addf %2, %4 : vector<64x128xf32>
    %cst_5 = arith.constant 0.000000e+00 : f32
    %6 = vector.broadcast %cst_5 : f32 to vector<64x128xf32>
    %7 = arith.maximumf %5, %6 : vector<64x128xf32>
    %8 = arith.truncf %7 : vector<64x128xf32> to vector<64x128xbf16>
    %c0_6 = arith.constant 0 : index
    %c0_7 = arith.constant 0 : index
    %9 = vector.load %arg4[%c0_6, %c0_7] : memref<128x256xbf16, #tpu.memory_space<vmem>>, vector<128x256xbf16>
    %cst_8 = arith.constant dense<0.000000e+00> : vector<64x256xf32>
    %10 = tpu.matmul %8, %9, %cst_8 {dimension_numbers = #tpu.dot_dimension_numbers<[1], [0], [0], [1], [0, 0, 1, 1], [], []>} : vector<64x128xbf16>, vector<128x256xbf16>, vector<64x256xf32> -> vector<64x256xf32>
    %c0_9 = arith.constant 0 : index
    %c0_10 = arith.constant 0 : index
    %11 = vector.load %arg5[%c0_9, %c0_10] : memref<1x256xf32, #tpu.memory_space<vmem>>, vector<1x256xf32>
    %12 = vector.broadcast %11 : vector<1x256xf32> to vector<64x256xf32>
    %13 = arith.addf %10, %12 : vector<64x256xf32>
    %cst_11 = arith.constant 2.000000e+00 : f32
    %14 = vector.broadcast %cst_11 : f32 to vector<64x256xf32>
    %15 = arith.subf %13, %14 : vector<64x256xf32>
    %cst_12 = arith.constant 0.000000e+00 : f32
    %16 = vector.broadcast %cst_12 : f32 to vector<64x256xf32>
    %17 = arith.subf %16, %15 : vector<64x256xf32>
    %18 = math.exp %17 : vector<64x256xf32>
    %cst_13 = arith.constant 1.000000e+00 : f32
    %19 = vector.broadcast %cst_13 : f32 to vector<64x256xf32>
    %20 = arith.addf %19, %18 : vector<64x256xf32>
    %21 = tpu.reciprocal %20 {approx = true} : vector<64x256xf32> -> vector<64x256xf32>
    %22 = arith.truncf %21 : vector<64x256xf32> to vector<64x256xbf16>
    %c0_14 = arith.constant 0 : index
    %c0_15 = arith.constant 0 : index
    %23 = vector.load %arg6[%c0_14, %c0_15] : memref<64x256xbf16, #tpu.memory_space<vmem>>, vector<64x256xbf16>
    tpu.vector_store %arg6[%c0_14, %c0_15], %22 {strides = array<i32>} : memref<64x256xbf16, #tpu.memory_space<vmem>>, vector<64x256xbf16>,
    return
  }
  func.func @transform_0(%arg0: i32) -> (i32, i32) {
    %c0_i32 = arith.constant 0 : i32
    %c0_i32_0 = arith.constant 0 : i32
    return %arg0, %c0_i32 : i32, i32
  }
  func.func @transform_1(%arg0: i32) -> (i32, i32) {
    %c0_i32 = arith.constant 0 : i32
    %c0_i32_0 = arith.constant 0 : i32
    %c0_i32_1 = arith.constant 0 : i32
    return %c0_i32, %c0_i32_0 : i32, i32
  }
  func.func @transform_2(%arg0: i32) -> (i32, i32) {
    %c0_i32 = arith.constant 0 : i32
    %c0_i32_0 = arith.constant 0 : i32
    %c0_i32_1 = arith.constant 0 : i32
    return %c0_i32, %c0_i32_0 : i32, i32
  }
  func.func @transform_3(%arg0: i32) -> (i32, i32) {
    %c0_i32 = arith.constant 0 : i32
    %c0_i32_0 = arith.constant 0 : i32
    %c0_i32_1 = arith.constant 0 : i32
    return %c0_i32, %c0_i32_0 : i32, i32
  }
  func.func @transform_4(%arg0: i32) -> (i32, i32) {
    %c0_i32 = arith.constant 0 : i32
    %c0_i32_0 = arith.constant 0 : i32
    %c0_i32_1 = arith.constant 0 : i32
    return %c0_i32, %c0_i32_0 : i32, i32
  }
  func.func @transform_5(%arg0: i32) -> (i32, i32) {
    %c0_i32 = arith.constant 0 : i32
    %c0_i32_0 = arith.constant 0 : i32
    return %arg0, %c0_i32 : i32, i32
  }
}

</mosaic_0001>

<llo_original>
// kernel: decoder_forward.1
$region0: #{decoder_forward.1}
  #allocation0 [shape = 'u32[]', space=smem, size = 0x4, offset = 0x4, fixed_abs, tag = 'smem constant byte address 0x4 - core index']
  #allocation1 [shape = 'u32[144,128]{1,0:T(1,128)}', space=vmem, size = 0x12000, scoped, tag = 'internal scratch']
  %s0 = inlined_call_operand.vmem [shape: bf16[256,32], index: 0, kind: input, shape index: {}]
  %s1 = inlined_call_operand.vmem [shape: bf16[32,128], index: 1, kind: input, shape index: {}]
  %s2 = inlined_call_operand.vmem [shape: f32[1,128], index: 2, kind: input, shape index: {}]
  %s3 = inlined_call_operand.vmem [shape: bf16[128,256], index: 3, kind: input, shape index: {}]
  %s4 = inlined_call_operand.vmem [shape: f32[1,256], index: 4, kind: input, shape index: {}]
  %s5 = inlined_call_operand.vmem [shape: bf16[256,256], index: 5, kind: output, shape index: {}]
  %s6 = sld [smem:[#allocation0]]
  $region53: #{decoder_forward.1} parent=0
    _
  %s8 = ssub.s32 1, %s6
  %s9 = scalar_select 0, %s8, %s6
  loop: start=0, step=1, limit=6
  $region2: #{decoder_forward.1} parent=0 // loop_pre_header
    _
  $region3: #{decoder_forward.1} parent=0 // loop_header
    %s11 = sphi 0, %s15
    %p12 = scmp.ge.s32.totalorder %s11, 6
    %s21 = sphi 0, %s23
    %s24 = sphi 0, %s21
    %s25 = sphi 0, %s24
    %s41 = sphi 0, %s25
    %s45 = sphi 0, %s45
    %s47 = sphi 0, %s45
    %s48 = sphi 0, %s47
    %s62 = sphi 0, %s48
    %s66 = sphi 0, %s66
    %s68 = sphi 0, %s66
    %s69 = sphi 0, %s68
    %s83 = sphi 0, %s69
    %s87 = sphi 0, %s87
    %s89 = sphi 0, %s87
    %s90 = sphi 0, %s89
    %s104 = sphi 0, %s90
    %s108 = sphi 0, %s108
    %s110 = sphi 0, %s108
    %s111 = sphi 0, %s110
    %s125 = sphi 0, %s111
    %s131 = sphi 0, %s133
    %s134 = sphi 0, %s131
    %s135 = sphi 0, %s134
    %s151 = sphi 0, %s135
  $region4: #{decoder_forward.1} parent=0 // loop_header_branch
    %14 = sbr.rel (%p12) target = $region8
  $region5: #{decoder_forward.1} parent=0 // loop_body
    %s16 = ssub.s32 %s11, 1
    %s17 = ssub.s32 %s11, 2
    %s18 = sadd.s32 %s11, 1
    %s19 = ssub.s32 %s11, %s18
    %p20 = scmp.eq.s32.totalorder %s19, 0
    %s22 = sadd.s32 %s21, 1
    %s23 = scalar_select %p20, %s21, %s22
    %p26 = pneg %p20
    %p27 = scmp.eq.s32.totalorder %s11, 3
    %p28 = por %p26, %p27
    %p29 = scmp.ne.s32.totalorder %s21, %s24
    %p30 = scmp.eq.s32.totalorder %s11, 0
    %p31 = por %p29, %p30
    %p32 = scmp.ne.s32.totalorder %s21, %s24
    %p33 = scmp.eq.s32.totalorder %s16, 3
    %p34 = por %p32, %p33
    %p35 = scmp.ne.s32.totalorder %s24, %s25
    %p36 = scmp.eq.s32.totalorder %s16, 0
    %p37 = por %p35, %p36
    %p38 = scmp.ne.s32.totalorder %s24, %s25
    %p39 = scmp.eq.s32.totalorder %s17, 3
    %p40 = por %p38, %p39
    %p42 = scmp.ne.s32.totalorder %s25, %s41
    %p43 = scmp.eq.s32.totalorder %s17, 0
    %p44 = por %p42, %p43
    %s46 = sadd.s32 %s45, 1
    %p49 = scmp.eq.s32.totalorder %s11, 3
    %p50 = scmp.ne.s32.totalorder %s45, %s47
    %p51 = scmp.eq.s32.totalorder %s11, 0
    %p52 = por %p50, %p51
    %p53 = scmp.ne.s32.totalorder %s45, %s47
    %p54 = scmp.eq.s32.totalorder %s16, 3
    %p55 = por %p53, %p54
    %p56 = scmp.ne.s32.totalorder %s47, %s48
    %p57 = scmp.eq.s32.totalorder %s16, 0
    %p58 = por %p56, %p57
    %p59 = scmp.ne.s32.totalorder %s47, %s48
    %p60 = scmp.eq.s32.totalorder %s17, 3
    %p61 = por %p59, %p60
    %p63 = scmp.ne.s32.totalorder %s48, %s62
    %p64 = scmp.eq.s32.totalorder %s17, 0
    %p65 = por %p63, %p64
    %s67 = sadd.s32 %s66, 1
    %p70 = scmp.eq.s32.totalorder %s11, 3
    %p71 = scmp.ne.s32.totalorder %s66, %s68
    %p72 = scmp.eq.s32.totalorder %s11, 0
    %p73 = por %p71, %p72
    %p74 = scmp.ne.s32.totalorder %s66, %s68
    %p75 = scmp.eq.s32.totalorder %s16, 3
    %p76 = por %p74, %p75
    %p77 = scmp.ne.s32.totalorder %s68, %s69
    %p78 = scmp.eq.s32.totalorder %s16, 0
    %p79 = por %p77, %p78
    %p80 = scmp.ne.s32.totalorder %s68, %s69
    %p81 = scmp.eq.s32.totalorder %s17, 3
    %p82 = por %p80, %p81
    %p84 = scmp.ne.s32.totalorder %s69, %s83
    %p85 = scmp.eq.s32.totalorder %s17, 0
    %p86 = por %p84, %p85
    %s88 = sadd.s32 %s87, 1
    %p91 = scmp.eq.s32.totalorder %s11, 3
    %p92 = scmp.ne.s32.totalorder %s87, %s89
    %p93 = scmp.eq.s32.totalorder %s11, 0
    %p94 = por %p92, %p93
    %p95 = scmp.ne.s32.totalorder %s87, %s89
    %p96 = scmp.eq.s32.totalorder %s16, 3
    %p97 = por %p95, %p96
    %p98 = scmp.ne.s32.totalorder %s89, %s90
    %p99 = scmp.eq.s32.totalorder %s16, 0
    %p100 = por %p98, %p99
    %p101 = scmp.ne.s32.totalorder %s89, %s90
    %p102 = scmp.eq.s32.totalorder %s17, 3
    %p103 = por %p101, %p102
    %p105 = scmp.ne.s32.totalorder %s90, %s104
    %p106 = scmp.eq.s32.totalorder %s17, 0
    %p107 = por %p105, %p106
    %s109 = sadd.s32 %s108, 1
    %p112 = scmp.eq.s32.totalorder %s11, 3
    %p113 = scmp.ne.s32.totalorder %s108, %s110
    %p114 = scmp.eq.s32.totalorder %s11, 0
    %p115 = por %p113, %p114
    %p116 = scmp.ne.s32.totalorder %s108, %s110
    %p117 = scmp.eq.s32.totalorder %s16, 3
    %p118 = por %p116, %p117
    %p119 = scmp.ne.s32.totalorder %s110, %s111
    %p120 = scmp.eq.s32.totalorder %s16, 0
    %p121 = por %p119, %p120
    %p122 = scmp.ne.s32.totalorder %s110, %s111
    %p123 = scmp.eq.s32.totalorder %s17, 3
    %p124 = por %p122, %p123
    %p126 = scmp.ne.s32.totalorder %s111, %s125
    %p127 = scmp.eq.s32.totalorder %s17, 0
    %p128 = por %p126, %p127
    %s129 = ssub.s32 %s11, %s18
    %p130 = scmp.eq.s32.totalorder %s129, 0
    %s132 = sadd.s32 %s131, 1
    %s133 = scalar_select %p130, %s131, %s132
    %p136 = pneg %p130
    %p137 = scmp.eq.s32.totalorder %s11, 3
    %p138 = por %p136, %p137
    %p139 = scmp.ne.s32.totalorder %s131, %s134
    %p140 = scmp.eq.s32.totalorder %s11, 0
    %p141 = por %p139, %p140
    %p142 = scmp.ne.s32.totalorder %s131, %s134
    %p143 = scmp.eq.s32.totalorder %s16, 3
    %p144 = por %p142, %p143
    %p145 = scmp.ne.s32.totalorder %s134, %s135
    %p146 = scmp.eq.s32.totalorder %s16, 0
    %p147 = por %p145, %p146
    %p148 = scmp.ne.s32.totalorder %s134, %s135
    %p149 = scmp.eq.s32.totalorder %s17, 3
    %p150 = por %p148, %p149
    %p152 = scmp.ne.s32.totalorder %s135, %s151
    %p153 = scmp.eq.s32.totalorder %s17, 0
    %p154 = por %p152, %p153
    %p155 = scmp.le.s32.totalorder 1, %s11
    %p156 = scmp.lt.s32.totalorder %s11, 5
    %p157 = pnand %p155, %p156
    %p158 = pneg %p157
    // Predicated region
    $region9: #{decoder_forward.1} parent=5 // pred_check
      _
    $region10: #{decoder_forward.1} parent=5 // pred_check_branch
      %160 = sbr.rel (%p157) target = $region12
    $region11: #{decoder_forward.1} parent=5 // pred_region
      %s161 = ssub.s32 %s11, 1
      // Predicated region
      $region13: #{decoder_forward.1} parent=11 // pred_check
        %p162 = pneg %p58
      $region14: #{decoder_forward.1} parent=11 // pred_check_branch
        %164 = sbr.rel (%p162) target = $region16
      $region15: #{decoder_forward.1} parent=11 // pred_region
        _
      $region16: #{decoder_forward.1} parent=11 // pred_fallthru
        _
      // Predicated region
      $region17: #{decoder_forward.1} parent=11 // pred_check
        %p165 = pneg %p79
      $region18: #{decoder_forward.1} parent=11 // pred_check_branch
        %167 = sbr.rel (%p165) target = $region20
      $region19: #{decoder_forward.1} parent=11 // pred_region
        _
      $region20: #{decoder_forward.1} parent=11 // pred_fallthru
        _
      // Predicated region
      $region21: #{decoder_forward.1} parent=11 // pred_check
        %p168 = pneg %p100
      $region22: #{decoder_forward.1} parent=11 // pred_check_branch
        %170 = sbr.rel (%p168) target = $region24
      $region23: #{decoder_forward.1} parent=11 // pred_region
        _
      $region24: #{decoder_forward.1} parent=11 // pred_fallthru
        _
      // Predicated region
      $region25: #{decoder_forward.1} parent=11 // pred_check
        %p171 = pneg %p121
      $region26: #{decoder_forward.1} parent=11 // pred_check_branch
        %173 = sbr.rel (%p171) target = $region28
      $region27: #{decoder_forward.1} parent=11 // pred_region
        _
      $region28: #{decoder_forward.1} parent=11 // pred_fallthru
        _
    $region12: #{decoder_forward.1} parent=5 // pred_fallthru
      _
    %p174 = scmp.lt.s32.totalorder %s11, 4
    // Predicated region
    $region29: #{decoder_forward.1} parent=5 // pred_check
      %p175 = pneg %p174
    $region30: #{decoder_forward.1} parent=5 // pred_check_branch
      %177 = sbr.rel (%p175) target = $region32
    $region31: #{decoder_forward.1} parent=5 // pred_region
      // Predicated region
      $region33: #{decoder_forward.1} parent=31 // pred_check
        %p178 = pneg %p31
      $region34: #{decoder_forward.1} parent=31 // pred_check_branch
        %180 = sbr.rel (%p178) target = $region36
      $region35: #{decoder_forward.1} parent=31 // pred_region
        %s181 = smul.u32 8, %s11
        %p182 = scmp.lt.s32.totalorder %s181, 31
        %s183 = scalar_select %p182, %s181, 31
        %s184 = smul.addr %s183, 4
        %s185 = scalar_lea.vmem %s0, %s184
        %s186 = smul.u32 8, %s11
      $region36: #{decoder_forward.1} parent=31 // pred_fallthru
        _
    $region32: #{decoder_forward.1} parent=5 // pred_fallthru
      _
    %p187 = scmp.le.s32.totalorder 1, %s11
    %p188 = scmp.lt.s32.totalorder %s11, 5
    %p189 = pnand %p187, %p188
    %p190 = pneg %p189
    // Predicated region
    $region37: #{decoder_forward.1} parent=5 // pred_check
      _
    $region38: #{decoder_forward.1} parent=5 // pred_check_branch
      %192 = sbr.rel (%p189) target = $region40
    $region39: #{decoder_forward.1} parent=5 // pred_region
      %s193 = ssub.s32 %s11, 1
      %s194 = smul.u32 8, %s16
      %p195 = scmp.lt.s32.totalorder %s194, 31
      %s196 = scalar_select %p195, %s194, 31
      %s197 = smul.addr %s196, 4
      %s198 = scalar_lea.vmem %s0, %s197
      %p199 = pneg %p37
      %p200 = pneg %p34
      %p201 = pneg %p58
      %p202 = pneg %p55
      %p203 = pneg %p79
      %p204 = pneg %p76
      %p205 = pneg %p100
      %p206 = pneg %p97
      %p207 = pneg %p121
      %p208 = pneg %p118
      %p209 = pneg %p147
      %p210 = pneg %p144
      %s211 = smul.u32 8, %s16
      %p212 = scmp.lt.s32.totalorder %s211, 31
      %s213 = scalar_select %p212, %s211, 31
      %s214 = smul.addr %s213, 2
      %s215 = smul.addr %s214, 4
      %s216 = scalar_lea.vmem %s5, %s215
      %s217 = smul.u32 8, %s16
      %p218 = scmp.lt.s32.totalorder %s217, 31
      %s219 = scalar_select %p218, %s217, 31
      %s220 = smul.addr %s219, 4
      %s221 = scalar_lea.vmem %s0, %s220
      %s222 = smul.u32 8, %s16
      %s223 = smul.u32 8, %s16
      %p224 = scmp.lt.s32.totalorder %s223, 31
      %s225 = scalar_select %p224, %s223, 31
      %s226 = smul.addr %s225, 2
      %s227 = smul.addr %s226, 4
      %s228 = scalar_lea.vmem %s5, %s227
      %s229 = smul.u32 8, %s16
      %v231 = vld [vmem:[%s221] sm:$0xf]
      %v232 = vld [vmem:[%s221 + $0x4] sm:$0xf]
      %v233 = vld [vmem:[%s221 + $0x8] sm:$0xf]
      %v234 = vld [vmem:[%s221 + $0xc] sm:$0xf]
      %v235 = vld [vmem:[%s221 + $0x10] sm:$0xf]
      %v236 = vld [vmem:[%s221 + $0x14] sm:$0xf]
      %v237 = vld [vmem:[%s221 + $0x18] sm:$0xf]
      %v238 = vld [vmem:[%s221 + $0x1c] sm:$0xf]
      %v239 = vld [vmem:[%s1] sm:$0xf]
      %v240 = vld [vmem:[%s1 + $0x4] sm:$0xf]
      %v241 = vld [vmem:[%s1 + $0x8] sm:$0xf]
      %v242 = vld [vmem:[%s1 + $0xc] sm:$0xf]
      %v243 = vld [vmem:[%s2] sm:$0x1]
      %v245 = vlaneseq
      %v246 = vshrl.u32 %v245, 7
      %v247 = vsub.s32 0, %v246
      %v248 = vrot.slane %v243, %v247
      %v258 = vunpack.c.l.b16 %v231
      %v259 = vunpack.c.l.b16 %v232
      %v260 = vunpack.c.l.b16 %v233
      %v261 = vunpack.c.l.b16 %v234
      %v262 = vunpack.c.l.b16 %v235
      %v263 = vunpack.c.l.b16 %v236
      %v264 = vunpack.c.l.b16 %v237
      %v265 = vunpack.c.l.b16 %v238
      %v266 = vpack.c.b16 %v259, %v258
      %v267 = vpack.c.b16 %v261, %v260
      %v268 = vpack.c.b16 %v263, %v262
      %v269 = vpack.c.b16 %v265, %v264
      %v274 = vunpack.c.l.b16 %v239
      %v275 = vunpack.c.l.b16 %v240
      %v276 = vunpack.c.l.b16 %v241
      %v277 = vunpack.c.l.b16 %v242
      %v278 = vpack.c.b16 %v275, %v274
      %v279 = vpack.c.b16 %v277, %v276
      %vm282 = vcmask 261120
      %v284 = vsel %vm282, %v266, 0
      %v287 = vsel %vm282, %v267, 0
      %v290 = vsel %vm282, %v268, 0
      %v293 = vsel %vm282, %v269, 0
      %295 = vmatprep.subr.bf16.mxu0 0
      %296 = vmatpush1.bf16.msra.mxu0 0
      %297 = vmatprep.subr.bf16.mxu0 0
      %298 = vmatpush1.bf16.msra.mxu0 0
      %299 = vmatprep.subr.bf16.mxu0 0
      %300 = vmatpush1.bf16.msra.mxu0 0
      %301 = vmatprep.subr.bf16.mxu0 0
      %302 = vmatpush1.bf16.msra.mxu0 0
      %303 = vmatprep.subr.bf16.mxu0 0
      %304 = vmatpush1.bf16.msra.mxu0 0
      %305 = vmatprep.subr.bf16.mxu0 0
      %306 = vmatpush1.bf16.msra.mxu0 0
      %307 = vmatprep.subr.bf16.mxu0 0
      %308 = vmatpush1.bf16.msra.mxu0 %v279
      %309 = vmatprep.subr.bf16.mxu0 0
      %310 = vmatpush1.bf16.msra.mxu0 %v278
      %311 = vmatprep.subr.bf16.mxu0 0
      %312 = vmatpush2.bf16.msra.mxu0 0
      %313 = vmatprep.subr.bf16.mxu0 0
      %314 = vmatpush2.bf16.msra.mxu0 0
      %315 = vmatprep.subr.bf16.mxu0 0
      %316 = vmatpush2.bf16.msra.mxu0 0
      %317 = vmatprep.subr.bf16.mxu0 0
      %318 = vmatpush2.bf16.msra.mxu0 0
      %319 = vmatprep.subr.bf16.mxu0 0
      %320 = vmatpush2.bf16.msra.mxu0 0
      %321 = vmatprep.subr.bf16.mxu0 0
      %322 = vmatpush2.bf16.msra.mxu0 0
      %323 = vmatprep.subr.bf16.mxu0 0
      %324 = vmatpush2.bf16.msra.mxu0 0
      %325 = vmatprep.subr.bf16.mxu0 0
      %326 = vmatpush2.bf16.msra.mxu0 0
      %327 = vmatprep.mubr.bf16.mxu0 0
      %328 = vmatmul.mubr.bf16.gmra.mxu0 %v284
      %v329 = vpop.f32.mrf.mxu0
      %v330 = vadd.f32 %v248, %v329
      %v331 = vpop.f32.mrf.mxu0
      %v332 = vpop.f32.mrf.mxu0
      %v333 = vadd.f32 %v248, %v332
      %v334 = vpop.f32.mrf.mxu0
      %335 = vmatprep.mubr.bf16.mxu0 0
      %336 = vmatmul.mubr.bf16.gmra.mxu0 %v287
      %v337 = vpop.f32.mrf.mxu0
      %v338 = vadd.f32 %v248, %v337
      %v339 = vpop.f32.mrf.mxu0
      %v340 = vpop.f32.mrf.mxu0
      %v341 = vadd.f32 %v248, %v340
      %v342 = vpop.f32.mrf.mxu0
      %343 = vmatprep.mubr.bf16.mxu0 0
      %344 = vmatmul.mubr.bf16.gmra.mxu0 %v290
      %v345 = vpop.f32.mrf.mxu0
      %v346 = vadd.f32 %v248, %v345
      %v347 = vpop.f32.mrf.mxu0
      %v348 = vpop.f32.mrf.mxu0
      %v349 = vadd.f32 %v248, %v348
      %v350 = vpop.f32.mrf.mxu0
      %351 = vmatprep.mubr.bf16.mxu0 0
      %352 = vmatmul.mubr.bf16.gmra.mxu0 %v293
      %v353 = vpop.f32.mrf.mxu0
      %v354 = vadd.f32 %v248, %v353
      %v355 = vpop.f32.mrf.mxu0
      %v356 = vpop.f32.mrf.mxu0
      %v357 = vadd.f32 %v248, %v356
      %v358 = vpop.f32.mrf.mxu0
      %359 = vdwg.mxu0
      %v360 = vmax.f32 %v330, 0.0
      %v361 = vmax.f32 %v333, 0.0
      %v362 = vmax.f32 %v338, 0.0
      %v363 = vmax.f32 %v341, 0.0
      %v364 = vmax.f32 %v346, 0.0
      %v365 = vmax.f32 %v349, 0.0
      %v366 = vmax.f32 %v354, 0.0
      %v367 = vmax.f32 %v357, 0.0
      %v368 = vpack.c.bf16 %v361, %v360
      %v369 = vpack.c.bf16 %v363, %v362
      %v370 = vpack.c.bf16 %v365, %v364
      %v371 = vpack.c.bf16 %v367, %v366
      %v372 = vld [vmem:[%s3] sm:$0xff]
      %v373 = vld [vmem:[%s3 + $0x8] sm:$0xff]
      %v374 = vld [vmem:[%s3 + $0x10] sm:$0xff]
      %v375 = vld [vmem:[%s3 + $0x18] sm:$0xff]
      %v376 = vld [vmem:[%s3 + $0x20] sm:$0xff]
      %v377 = vld [vmem:[%s3 + $0x28] sm:$0xff]
      %v378 = vld [vmem:[%s3 + $0x30] sm:$0xff]
      %v379 = vld [vmem:[%s3 + $0x38] sm:$0xff]
      %v380 = vld [vmem:[%s3 + $0x40] sm:$0xff]
      %v381 = vld [vmem:[%s3 + $0x48] sm:$0xff]
      %v382 = vld [vmem:[%s3 + $0x50] sm:$0xff]
      %v383 = vld [vmem:[%s3 + $0x58] sm:$0xff]
      %v384 = vld [vmem:[%s3 + $0x60] sm:$0xff]
      %v385 = vld [vmem:[%s3 + $0x68] sm:$0xff]
      %v386 = vld [vmem:[%s3 + $0x70] sm:$0xff]
      %v387 = vld [vmem:[%s3 + $0x78] sm:$0xff]
      %v388 = vld [vmem:[%s4] sm:$0x3]
      %v390 = vlaneseq
      %v391 = vshrl.u32 %v390, 7
      %v392 = vsub.s32 0, %v391
      %v393 = vrot.slane %v388, %v392
      %v394 = vlaneseq
      %v395 = vshrl.u32 %v394, 7
      %v396 = vsub.s32 1, %v395
      %v397 = vrot.slane %v388, %v396
      %v416 = vunpack.c.l.b16 %v372
      %v417 = vunpack.c.h.b16 %v372
      %v418 = vunpack.c.l.b16 %v373
      %v419 = vunpack.c.h.b16 %v373
      %v420 = vunpack.c.l.b16 %v374
      %v421 = vunpack.c.h.b16 %v374
      %v422 = vunpack.c.l.b16 %v375
      %v423 = vunpack.c.h.b16 %v375
      %v424 = vunpack.c.l.b16 %v376
      %v425 = vunpack.c.h.b16 %v376
      %v426 = vunpack.c.l.b16 %v377
      %v427 = vunpack.c.h.b16 %v377
      %v428 = vunpack.c.l.b16 %v378
      %v429 = vunpack.c.h.b16 %v378
      %v430 = vunpack.c.l.b16 %v379
      %v431 = vunpack.c.h.b16 %v379
      %v432 = vunpack.c.l.b16 %v380
      %v433 = vunpack.c.h.b16 %v380
      %v434 = vunpack.c.l.b16 %v381
      %v435 = vunpack.c.h.b16 %v381
      %v436 = vunpack.c.l.b16 %v382
      %v437 = vunpack.c.h.b16 %v382
      %v438 = vunpack.c.l.b16 %v383
      %v439 = vunpack.c.h.b16 %v383
      %v440 = vunpack.c.l.b16 %v384
      %v441 = vunpack.c.h.b16 %v384
      %v442 = vunpack.c.l.b16 %v385
      %v443 = vunpack.c.h.b16 %v385
      %v444 = vunpack.c.l.b16 %v386
      %v445 = vunpack.c.h.b16 %v386
      %v446 = vunpack.c.l.b16 %v387
      %v447 = vunpack.c.h.b16 %v387
      %v448 = vpack.c.b16 %v418, %v416
      %v449 = vpack.c.b16 %v419, %v417
      %v450 = vpack.c.b16 %v422, %v420
      %v451 = vpack.c.b16 %v423, %v421
      %v452 = vpack.c.b16 %v426, %v424
      %v453 = vpack.c.b16 %v427, %v425
      %v454 = vpack.c.b16 %v430, %v428
      %v455 = vpack.c.b16 %v431, %v429
      %v456 = vpack.c.b16 %v434, %v432
      %v457 = vpack.c.b16 %v435, %v433
      %v458 = vpack.c.b16 %v438, %v436
      %v459 = vpack.c.b16 %v439, %v437
      %v460 = vpack.c.b16 %v442, %v440
      %v461 = vpack.c.b16 %v443, %v441
      %v462 = vpack.c.b16 %v446, %v444
      %v463 = vpack.c.b16 %v447, %v445
      %480 = vmatprep.subr.bf16.mxu0 %v463
      %481 = vmatpush1.bf16.msra.mxu0 %v462
      %482 = vmatprep.subr.bf16.mxu0 %v461
      %483 = vmatpush1.bf16.msra.mxu0 %v460
      %484 = vmatprep.subr.bf16.mxu0 %v459
      %485 = vmatpush1.bf16.msra.mxu0 %v458
      %486 = vmatprep.subr.bf16.mxu0 %v457
      %487 = vmatpush1.bf16.msra.mxu0 %v456
      %488 = vmatprep.subr.bf16.mxu0 %v455
      %489 = vmatpush1.bf16.msra.mxu0 %v454
      %490 = vmatprep.subr.bf16.mxu0 %v453
      %491 = vmatpush1.bf16.msra.mxu0 %v452
      %492 = vmatprep.subr.bf16.mxu0 %v451
      %493 = vmatpush1.bf16.msra.mxu0 %v450
      %494 = vmatprep.subr.bf16.mxu0 %v449
      %495 = vmatpush1.bf16.msra.mxu0 %v448
      %496 = vmatprep.subr.bf16.mxu0 0
      %497 = vmatpush2.bf16.msra.mxu0 0
      %498 = vmatprep.subr.bf16.mxu0 0
      %499 = vmatpush2.bf16.msra.mxu0 0
      %500 = vmatprep.subr.bf16.mxu0 0
      %501 = vmatpush2.bf16.msra.mxu0 0
      %502 = vmatprep.subr.bf16.mxu0 0
      %503 = vmatpush2.bf16.msra.mxu0 0
      %504 = vmatprep.subr.bf16.mxu0 0
      %505 = vmatpush2.bf16.msra.mxu0 0
      %506 = vmatprep.subr.bf16.mxu0 0
      %507 = vmatpush2.bf16.msra.mxu0 0
      %508 = vmatprep.subr.bf16.mxu0 0
      %509 = vmatpush2.bf16.msra.mxu0 0
      %510 = vmatprep.subr.bf16.mxu0 0
      %511 = vmatpush2.bf16.msra.mxu0 0
      %512 = vmatprep.mubr.bf16.mxu0 0
      %513 = vmatmul.mubr.bf16.gmra.mxu0 %v368
      %v514 = vpop.f32.mrf.mxu0
      %v515 = vadd.f32 %v393, %v514
      %v516 = vpop.f32.mrf.mxu0
      %v517 = vadd.f32 %v397, %v516
      %v518 = vpop.f32.mrf.mxu0
      %v519 = vadd.f32 %v393, %v518
      %v520 = vpop.f32.mrf.mxu0
      %v521 = vadd.f32 %v397, %v520
      %522 = vmatprep.mubr.bf16.mxu0 0
      %523 = vmatmul.mubr.bf16.gmra.mxu0 %v369
      %v524 = vpop.f32.mrf.mxu0
      %v525 = vadd.f32 %v393, %v524
      %v526 = vpop.f32.mrf.mxu0
      %v527 = vadd.f32 %v397, %v526
      %v528 = vpop.f32.mrf.mxu0
      %v529 = vadd.f32 %v393, %v528
      %v530 = vpop.f32.mrf.mxu0
      %v531 = vadd.f32 %v397, %v530
      %532 = vmatprep.mubr.bf16.mxu0 0
      %533 = vmatmul.mubr.bf16.gmra.mxu0 %v370
      %v534 = vpop.f32.mrf.mxu0
      %v535 = vadd.f32 %v393, %v534
      %v536 = vpop.f32.mrf.mxu0
      %v537 = vadd.f32 %v397, %v536
      %v538 = vpop.f32.mrf.mxu0
      %v539 = vadd.f32 %v393, %v538
      %v540 = vpop.f32.mrf.mxu0
      %v541 = vadd.f32 %v397, %v540
      %542 = vmatprep.mubr.bf16.mxu0 0
      %543 = vmatmul.mubr.bf16.gmra.mxu0 %v371
      %v544 = vpop.f32.mrf.mxu0
      %v545 = vadd.f32 %v393, %v544
      %v546 = vpop.f32.mrf.mxu0
      %v547 = vadd.f32 %v397, %v546
      %v548 = vpop.f32.mrf.mxu0
      %v549 = vadd.f32 %v393, %v548
      %v550 = vpop.f32.mrf.mxu0
      %v551 = vadd.f32 %v397, %v550
      %552 = vdwg.mxu0
      %v553 = vsub.f32 %v515, 2.0
      %v554 = vsub.f32 %v517, 2.0
      %v555 = vsub.f32 %v519, 2.0
      %v556 = vsub.f32 %v521, 2.0
      %v557 = vsub.f32 %v525, 2.0
      %v558 = vsub.f32 %v527, 2.0
      %v559 = vsub.f32 %v529, 2.0
      %v560 = vsub.f32 %v531, 2.0
      %v561 = vsub.f32 %v535, 2.0
      %v562 = vsub.f32 %v537, 2.0
      %v563 = vsub.f32 %v539, 2.0
      %v564 = vsub.f32 %v541, 2.0
      %v565 = vsub.f32 %v545, 2.0
      %v566 = vsub.f32 %v547, 2.0
      %v567 = vsub.f32 %v549, 2.0
      %v568 = vsub.f32 %v551, 2.0
      %v569 = vsub.f32 0.0, %v553
      %v570 = vsub.f32 0.0, %v554
      %v571 = vsub.f32 0.0, %v555
      %v572 = vsub.f32 0.0, %v556
      %v573 = vsub.f32 0.0, %v557
      %v574 = vsub.f32 0.0, %v558
      %v575 = vsub.f32 0.0, %v559
      %v576 = vsub.f32 0.0, %v560
      %v577 = vsub.f32 0.0, %v561
      %v578 = vsub.f32 0.0, %v562
      %v579 = vsub.f32 0.0, %v563
      %v580 = vsub.f32 0.0, %v564
      %v581 = vsub.f32 0.0, %v565
      %v582 = vsub.f32 0.0, %v566
      %v583 = vsub.f32 0.0, %v567
      %v584 = vsub.f32 0.0, %v568
      %v585 = vmul.f32 %v569, 1.442695
      %v586 = vpow.pop %v585
      %v587 = vmul.f32 %v570, 1.442695
      %v588 = vpow.pop %v587
      %v589 = vmul.f32 %v571, 1.442695
      %v590 = vpow.pop %v589
      %v591 = vmul.f32 %v572, 1.442695
      %v592 = vpow.pop %v591
      %v593 = vmul.f32 %v573, 1.442695
      %v594 = vpow.pop %v593
      %v595 = vmul.f32 %v574, 1.442695
      %v596 = vpow.pop %v595
      %v597 = vmul.f32 %v575, 1.442695
      %v598 = vpow.pop %v597
      %v599 = vmul.f32 %v576, 1.442695
      %v600 = vpow.pop %v599
      %v601 = vmul.f32 %v577, 1.442695
      %v602 = vpow.pop %v601
      %v603 = vmul.f32 %v578, 1.442695
      %v604 = vpow.pop %v603
      %v605 = vmul.f32 %v579, 1.442695
      %v606 = vpow.pop %v605
      %v607 = vmul.f32 %v580, 1.442695
      %v608 = vpow.pop %v607
      %v609 = vmul.f32 %v581, 1.442695
      %v610 = vpow.pop %v609
      %v611 = vmul.f32 %v582, 1.442695
      %v612 = vpow.pop %v611
      %v613 = vmul.f32 %v583, 1.442695
      %v614 = vpow.pop %v613
      %v615 = vmul.f32 %v584, 1.442695
      %v616 = vpow.pop %v615
      %v617 = vadd.f32 %v586, 1.0
      %v618 = vadd.f32 %v588, 1.0
      %v619 = vadd.f32 %v590, 1.0
      %v620 = vadd.f32 %v592, 1.0
      %v621 = vadd.f32 %v594, 1.0
      %v622 = vadd.f32 %v596, 1.0
      %v623 = vadd.f32 %v598, 1.0
      %v624 = vadd.f32 %v600, 1.0
      %v625 = vadd.f32 %v602, 1.0
      %v626 = vadd.f32 %v604, 1.0
      %v627 = vadd.f32 %v606, 1.0
      %v628 = vadd.f32 %v608, 1.0
      %v629 = vadd.f32 %v610, 1.0
      %v630 = vadd.f32 %v612, 1.0
      %v631 = vadd.f32 %v614, 1.0
      %v632 = vadd.f32 %v616, 1.0
      %v633 = vrcp.pop %v617
      %v634 = vrcp.pop %v618
      %v635 = vrcp.pop %v619
      %v636 = vrcp.pop %v620
      %v637 = vrcp.pop %v621
      %v638 = vrcp.pop %v622
      %v639 = vrcp.pop %v623
      %v640 = vrcp.pop %v624
      %v641 = vrcp.pop %v625
      %v642 = vrcp.pop %v626
      %v643 = vrcp.pop %v627
      %v644 = vrcp.pop %v628
      %v645 = vrcp.pop %v629
      %v646 = vrcp.pop %v630
      %v647 = vrcp.pop %v631
      %v648 = vrcp.pop %v632
      %v649 = vpack.c.bf16 %v635, %v633
      %v650 = vpack.c.bf16 %v636, %v634
      %v651 = vpack.c.bf16 %v639, %v637
      %v652 = vpack.c.bf16 %v640, %v638
      %v653 = vpack.c.bf16 %v643, %v641
      %v654 = vpack.c.bf16 %v644, %v642
      %v655 = vpack.c.bf16 %v647, %v645
      %v656 = vpack.c.bf16 %v648, %v646
      %v665 = vunpack.c.l.b16 %v649
      %v666 = vunpack.c.l.b16 %v650
      %v667 = vunpack.c.h.b16 %v649
      %v668 = vunpack.c.h.b16 %v650
      %v669 = vunpack.c.l.b16 %v651
      %v670 = vunpack.c.l.b16 %v652
      %v671 = vunpack.c.h.b16 %v651
      %v672 = vunpack.c.h.b16 %v652
      %v673 = vunpack.c.l.b16 %v653
      %v674 = vunpack.c.l.b16 %v654
      %v675 = vunpack.c.h.b16 %v653
      %v676 = vunpack.c.h.b16 %v654
      %v677 = vunpack.c.l.b16 %v655
      %v678 = vunpack.c.l.b16 %v656
      %v679 = vunpack.c.h.b16 %v655
      %v680 = vunpack.c.h.b16 %v656
      %v681 = vpack.c.b16 %v666, %v665
      %v682 = vpack.c.b16 %v668, %v667
      %v683 = vpack.c.b16 %v670, %v669
      %v684 = vpack.c.b16 %v672, %v671
      %v685 = vpack.c.b16 %v674, %v673
      %v686 = vpack.c.b16 %v676, %v675
      %v687 = vpack.c.b16 %v678, %v677
      %v688 = vpack.c.b16 %v680, %v679
      %697 = vst [vmem:[%s228] sm:$0xff] %v681
      %698 = vst [vmem:[%s228 + $0x8] sm:$0xff] %v682
      %699 = vst [vmem:[%s228 + $0x10] sm:$0xff] %v683
      %700 = vst [vmem:[%s228 + $0x18] sm:$0xff] %v684
      %701 = vst [vmem:[%s228 + $0x20] sm:$0xff] %v685
      %702 = vst [vmem:[%s228 + $0x28] sm:$0xff] %v686
      %703 = vst [vmem:[%s228 + $0x30] sm:$0xff] %v687
      %704 = vst [vmem:[%s228 + $0x38] sm:$0xff] %v688
      %s705 = smul.u32 8, %s16
      %p706 = scmp.lt.s32.totalorder %s705, 31
      %s707 = scalar_select %p706, %s705, 31
      %s708 = smul.addr %s707, 2
      %s709 = smul.addr %s708, 4
      %s710 = scalar_lea.vmem %s5, %s709
      // Predicated region
      $region41: #{decoder_forward.1} parent=39 // pred_check
        %p711 = pneg %p144
      $region42: #{decoder_forward.1} parent=39 // pred_check_branch
        %713 = sbr.rel (%p711) target = $region44
      $region43: #{decoder_forward.1} parent=39 // pred_region
        %s714 = smul.u32 8, %s16
      $region44: #{decoder_forward.1} parent=39 // pred_fallthru
        _
    $region40: #{decoder_forward.1} parent=5 // pred_fallthru
      _
    %p715 = scmp.le.s32.totalorder 2, %s11
    // Predicated region
    $region45: #{decoder_forward.1} parent=5 // pred_check
      %p716 = pneg %p715
    $region46: #{decoder_forward.1} parent=5 // pred_check_branch
      %718 = sbr.rel (%p716) target = $region48
    $region47: #{decoder_forward.1} parent=5 // pred_region
      %s719 = ssub.s32 %s11, 2
      // Predicated region
      $region49: #{decoder_forward.1} parent=47 // pred_check
        %p720 = pneg %p150
      $region50: #{decoder_forward.1} parent=47 // pred_check_branch
        %722 = sbr.rel (%p720) target = $region52
      $region51: #{decoder_forward.1} parent=47 // pred_region
        %s723 = smul.u32 8, %s17
        %p724 = scmp.lt.s32.totalorder %s723, 31
        %s725 = scalar_select %p724, %s723, 31
        %s726 = smul.addr %s725, 2
        %s727 = smul.addr %s726, 4
        %s728 = scalar_lea.vmem %s5, %s727
      $region52: #{decoder_forward.1} parent=47 // pred_fallthru
        _
    $region48: #{decoder_forward.1} parent=5 // pred_fallthru
      _
  $region6: #{decoder_forward.1} parent=0 // loop_footer
    %s15 = sadd.s32 1, %s11
  $region7: #{decoder_forward.1} parent=0 // loop_footer_branch
    %10 = sbr.rel target = $region3
  $region8: #{decoder_forward.1} parent=0 // loop_exit
    _

</llo_original>
